<compile_context>
chip_gen: v7x
topology: tpu7x:2x2x1
jax: 0.10.0
libtpu: 0.0.40
codegen_flags: <defaults>
</compile_context>

<pallas_src>
import functools
import math

import jax
import jax.numpy as jnp
from jax.experimental import pallas as pl
from jax.experimental.pallas import tpu as pltpu

R_EARTH_KM = 6371.0
DEG2RAD = math.pi / 180.0

LANES = 128
SUBLANES = 8
MAX_BLOCK_ROWS = 2048   # K*2048*128*4B ~= 4-5 MiB / buffer; x2 double-buffer fits 32 MiB scoped VMEM
NCORES = 2              # leading "parallel" grid axis: shards row-tiles across TensorCores on v7x


def _hybrid_haversine_kernel(x_ref, out_ref, s1_ref, s2_ref, *, has_weight):
    step = pl.program_id(1)

    @pl.when(step == 0)
    def _init():
        s1_ref[...] = jnp.zeros_like(s1_ref)
        s2_ref[...] = jnp.zeros_like(s2_ref)

    lon_p = x_ref[0]
    lat_p = x_ref[1]
    lon_t = x_ref[2]
    lat_t = x_ref[3]

    # Haversine: point 1 = true, point 2 = pred (matches the module's call order).
    phi1 = lat_t * DEG2RAD
    phi2 = lat_p * DEG2RAD
    dphi = (lat_p - lat_t) * DEG2RAD
    dlam = (lon_p - lon_t) * DEG2RAD

    sin_dphi = jnp.sin(0.5 * dphi)
    sin_dlam = jnp.sin(0.5 * dlam)
    a = sin_dphi * sin_dphi + jnp.cos(phi1) * jnp.cos(phi2) * sin_dlam * sin_dlam
    a = jnp.clip(a, 0.0, 1.0)  # guard rounding; keeps sqrt argument >= 0
    # c = 2*asin(sqrt(a)) written as atan2(sin c, cos c) = atan2(2*sqrt(a(1-a)), 1-2a):
    # one sqrt fewer than atan2(sqrt(a), sqrt(1-a)) and mathematically identical on [0, pi].
    c = jnp.arctan2(2.0 * jnp.sqrt(a * (1.0 - a)), 1.0 - 2.0 * a)
    d = R_EARTH_KM * c                      # zero-padded rows give d == 0 exactly
    if has_weight:
        d = d * x_ref[4]                    # padded weights are 0 as well

    # Fold the tile into a single (8, 128)-vreg accumulator: pure vreg-vs-vreg VALU adds,
    # no cross-lane (XLU) work and negligible scratch traffic in the steady state.
    d3 = d.reshape(d.shape[0] // SUBLANES, SUBLANES, LANES)
    s1_ref[...] += jnp.sum(d3, axis=0)
    s2_ref[...] += jnp.sum(d3 * d3, axis=0)

    @pl.when(step == pl.num_programs(1) - 1)
    def _write_partials():
        # Raw per-core partial sums; scalar reduce + mean/std/alpha blend happens in JAX.
        out_ref[0, 0] = s1_ref[...]
        out_ref[0, 1] = s2_ref[...]


def hybrid_haversine_loss(predictions, targets, sample_weight=None, alpha=0.5):
    """predictions, targets: (N, 2) arrays with columns (lon, lat)."""
    n = predictions.shape[0]
    has_weight = sample_weight is not None

    # Single fused pack: (lon_p, lat_p, lon_t, lat_t[, w]) -> one lane-dense (K, rows, 128) slab.
    cols = jnp.concatenate([predictions.astype(jnp.float32),
                            targets.astype(jnp.float32)], axis=1)        # (N, 4)
    if has_weight:
        w = jnp.ravel(sample_weight).astype(jnp.float32).reshape(-1, 1)
        cols = jnp.concatenate([cols, w], axis=1)                        # (N, 5)
    k = cols.shape[1]

    # Lane-dense rows, padded only as much as needed (waste bounded to ~1/8 of the data).
    rows0 = max(1, -(-n // LANES))
    rows0 = ((rows0 + SUBLANES - 1) // SUBLANES) * SUBLANES
    block_rows = SUBLANES
    for cand in (8, 16, 32, 64, 128, 256, 512, 1024, 2048, 4096):
        if cand > MAX_BLOCK_ROWS:
            break
        padded = -(-rows0 // (cand * NCORES)) * (cand * NCORES)
        if padded <= max(rows0 + rows0 // 8, SUBLANES * NCORES):
            block_rows = cand
    rows = -(-rows0 // (block_rows * NCORES)) * (block_rows * NCORES)
    pad = rows * LANES - n

    packed = jnp.pad(cols.T, ((0, 0), (0, pad))).reshape(k, rows, LANES)

    inner = rows // (block_rows * NCORES)

    partials = pl.pallas_call(
        functools.partial(_hybrid_haversine_kernel, has_weight=has_weight),
        out_shape=jax.ShapeDtypeStruct((NCORES, 2, SUBLANES, LANES), jnp.float32),
        grid=(NCORES, inner),
        in_specs=[pl.BlockSpec((k, block_rows, LANES),
                               lambda c, i: (0, c * inner + i, 0))],
        out_specs=pl.BlockSpec((1, 2, SUBLANES, LANES), lambda c, i: (c, 0, 0, 0)),
        scratch_shapes=[pltpu.VMEM((SUBLANES, LANES), jnp.float32),
                        pltpu.VMEM((SUBLANES, LANES), jnp.float32)],
        compiler_params=pltpu.CompilerParams(
            dimension_semantics=("parallel", "arbitrary"),
            vmem_limit_bytes=32 * 1024 * 1024),
    )(packed)

    # Tiny final reduction + blend in plain JAX (outside the kernel, per review).
    s1 = jnp.sum(partials[:, 0])
    s2 = jnp.sum(partials[:, 1])
    mean = s1 / n
    # n == 1: unbiased std is undefined (torch returns nan) -> NaN propagates on purpose.
    inv_nm1 = 1.0 / (n - 1) if n > 1 else float("nan")
    # Single-pass unbiased variance; (8,128) x NCORES binned partials keep f32
    # cancellation error modest. TODO(synk): Welford/shifted form for extreme N.
    var = (s2 - s1 * mean) * inv_nm1
    std = jnp.sqrt(jnp.maximum(var, 0.0))
    return alpha * mean + (1.0 - alpha) * std


def _reference_loss(predictions, targets, sample_weight, alpha):
    """Pure-JAX reference of the intended forward semantics."""
    lon_t, lat_t = targets[:, 0], targets[:, 1]
    lon_p, lat_p = predictions[:, 0], predictions[:, 1]
    phi1, phi2 = jnp.deg2rad(lat_t), jnp.deg2rad(lat_p)
    dphi = jnp.deg2rad(lat_p - lat_t)
    dlam = jnp.deg2rad(lon_p - lon_t)
    a = jnp.sin(dphi / 2) ** 2 + jnp.cos(phi1) * jnp.cos(phi2) * jnp.sin(dlam / 2) ** 2
    c = 2.0 * jnp.arctan2(jnp.sqrt(a), jnp.sqrt(1.0 - a))
    wl = R_EARTH_KM * c * sample_weight
    mean = jnp.mean(wl)
    std = jnp.std(wl, ddof=1)
    return alpha * mean + (1.0 - alpha) * std


if __name__ == "__main__":
    key = jax.random.PRNGKey(0)
    k1, k2, k3, k4, k5 = jax.random.split(key, 5)

    n = 200
    lon_pred = jax.random.uniform(k1, (n, 1), minval=-180.0, maxval=180.0)
    lat_pred = jax.random.uniform(k2, (n, 1), minval=-90.0, maxval=90.0)
    lon_true = jax.random.uniform(k3, (n, 1), minval=-180.0, maxval=180.0)
    lat_true = jax.random.uniform(k4, (n, 1), minval=-90.0, maxval=90.0)
    weights = jax.random.uniform(k5, (n,), minval=0.1, maxval=2.0)

    predictions = jnp.concatenate([lon_pred, lat_pred], axis=1)  # (N, 2) = (lon, lat)
    targets = jnp.concatenate([lon_true, lat_true], axis=1)      # (N, 2) = (lon, lat)

    loss_unw = hybrid_haversine_loss(predictions, targets, alpha=0.5)
    loss_w = hybrid_haversine_loss(predictions, targets, sample_weight=weights, alpha=0.5)
    jax.block_until_ready((loss_unw, loss_w))

    ref_unw = _reference_loss(predictions.astype(jnp.float32), targets.astype(jnp.float32),
                              jnp.ones((n,), jnp.float32), 0.5)
    ref_w = _reference_loss(predictions.astype(jnp.float32), targets.astype(jnp.float32),
                            weights.astype(jnp.float32), 0.5)

    assert loss_unw.shape == () and bool(jnp.isfinite(loss_unw))
    assert loss_w.shape == () and bool(jnp.isfinite(loss_w))
    assert bool(jnp.allclose(loss_unw, ref_unw, rtol=1e-3, atol=1e-2)), (loss_unw, ref_unw)
    assert bool(jnp.allclose(loss_w, ref_w, rtol=1e-3, atol=1e-2)), (loss_w, ref_w)
    print("KERNEL_OK")
</pallas_src>

<mosaic_0001>
module attributes {stable_mosaic.version = 11 : i64} {
  func.func @_hybrid_haversine_kernel(%arg0: i32, %arg1: i32, %arg2: memref<4x8x128xf32, #tpu.memory_space<vmem>>, %arg3: memref<1x2x8x128xf32, #tpu.memory_space<vmem>>, %arg4: memref<8x128xf32, #tpu.memory_space<vmem>>, %arg5: memref<8x128xf32, #tpu.memory_space<vmem>>) attributes {dimension_semantics = [#tpu.dimension_semantics<parallel>, #tpu.dimension_semantics<arbitrary>], iteration_bounds = array<i64: 2, 1>, scalar_prefetch = 0 : i64, scratch_operands = 2 : i64, tpu.core_type = #tpu.core_type<tc>, window_params = [{transform_indices = @transform_0, window_bounds = array<i64: 4, 8, 128>}, {transform_indices = @transform_1, window_bounds = array<i64: 1, 2, 8, 128>}]} {
    %c0_i32 = arith.constant 0 : i32
    %0 = arith.cmpi eq, %arg1, %c0_i32 : i32
    %1 = arith.extui %0 : i1 to i32
    %c0_i32_0 = arith.constant 0 : i32
    %2 = arith.cmpi ne, %1, %c0_i32_0 : i32
    scf.if %2 {
      %cst_33 = arith.constant 0.000000e+00 : f32
      %64 = vector.broadcast %cst_33 : f32 to vector<8x128xf32>
      %c0_34 = arith.constant 0 : index
      %c0_35 = arith.constant 0 : index
      %65 = vector.load %arg4[%c0_34, %c0_35] : memref<8x128xf32, #tpu.memory_space<vmem>>, vector<8x128xf32>
      tpu.vector_store %arg4[%c0_34, %c0_35], %64 {strides = array<i32>} : memref<8x128xf32, #tpu.memory_space<vmem>>, vector<8x128xf32>,
      %cst_36 = arith.constant 0.000000e+00 : f32
      %66 = vector.broadcast %cst_36 : f32 to vector<8x128xf32>
      %c0_37 = arith.constant 0 : index
      %c0_38 = arith.constant 0 : index
      %67 = vector.load %arg5[%c0_37, %c0_38] : memref<8x128xf32, #tpu.memory_space<vmem>>, vector<8x128xf32>
      tpu.vector_store %arg5[%c0_37, %c0_38], %66 {strides = array<i32>} : memref<8x128xf32, #tpu.memory_space<vmem>>, vector<8x128xf32>,
    } else {
    }
    %c0 = arith.constant 0 : index
    %c0_1 = arith.constant 0 : index
    %c0_2 = arith.constant 0 : index
    %3 = vector.load %arg2[%c0, %c0_1, %c0_2] : memref<4x8x128xf32, #tpu.memory_space<vmem>>, vector<1x8x128xf32>
    %4 = vector.shape_cast %3 : vector<1x8x128xf32> to vector<8x128xf32>
    %c1 = arith.constant 1 : index
    %c0_3 = arith.constant 0 : index
    %c0_4 = arith.constant 0 : index
    %5 = vector.load %arg2[%c1, %c0_3, %c0_4] : memref<4x8x128xf32, #tpu.memory_space<vmem>>, vector<1x8x128xf32>
    %6 = vector.shape_cast %5 : vector<1x8x128xf32> to vector<8x128xf32>
    %c2 = arith.constant 2 : index
    %c0_5 = arith.constant 0 : index
    %c0_6 = arith.constant 0 : index
    %7 = vector.load %arg2[%c2, %c0_5, %c0_6] : memref<4x8x128xf32, #tpu.memory_space<vmem>>, vector<1x8x128xf32>
    %8 = vector.shape_cast %7 : vector<1x8x128xf32> to vector<8x128xf32>
    %c3 = arith.constant 3 : index
    %c0_7 = arith.constant 0 : index
    %c0_8 = arith.constant 0 : index
    %9 = vector.load %arg2[%c3, %c0_7, %c0_8] : memref<4x8x128xf32, #tpu.memory_space<vmem>>, vector<1x8x128xf32>
    %10 = vector.shape_cast %9 : vector<1x8x128xf32> to vector<8x128xf32>
    %cst = arith.constant 0.0174532924 : f32
    %11 = vector.broadcast %cst : f32 to vector<8x128xf32>
    %12 = arith.mulf %10, %11 : vector<8x128xf32>
    %cst_9 = arith.constant 0.0174532924 : f32
    %13 = vector.broadcast %cst_9 : f32 to vector<8x128xf32>
    %14 = arith.mulf %6, %13 : vector<8x128xf32>
    %15 = arith.subf %6, %10 : vector<8x128xf32>
    %cst_10 = arith.constant 0.0174532924 : f32
    %16 = vector.broadcast %cst_10 : f32 to vector<8x128xf32>
    %17 = arith.mulf %15, %16 : vector<8x128xf32>
    %18 = arith.subf %4, %8 : vector<8x128xf32>
    %cst_11 = arith.constant 0.0174532924 : f32
    %19 = vector.broadcast %cst_11 : f32 to vector<8x128xf32>
    %20 = arith.mulf %18, %19 : vector<8x128xf32>
    %cst_12 = arith.constant 5.000000e-01 : f32
    %21 = vector.broadcast %cst_12 : f32 to vector<8x128xf32>
    %22 = arith.mulf %21, %17 : vector<8x128xf32>
    %23 = math.sin %22 : vector<8x128xf32>
    %cst_13 = arith.constant 5.000000e-01 : f32
    %24 = vector.broadcast %cst_13 : f32 to vector<8x128xf32>
    %25 = arith.mulf %24, %20 : vector<8x128xf32>
    %26 = math.sin %25 : vector<8x128xf32>
    %27 = arith.mulf %23, %23 : vector<8x128xf32>
    %28 = math.cos %12 : vector<8x128xf32>
    %29 = math.cos %14 : vector<8x128xf32>
    %30 = arith.mulf %28, %29 : vector<8x128xf32>
    %31 = arith.mulf %30, %26 : vector<8x128xf32>
    %32 = arith.mulf %31, %26 : vector<8x128xf32>
    %33 = arith.addf %27, %32 : vector<8x128xf32>
    %cst_14 = arith.constant 0.000000e+00 : f32
    %cst_15 = arith.constant 1.000000e+00 : f32
    %34 = vector.broadcast %cst_14 : f32 to vector<8x128xf32>
    %35 = arith.maximumf %34, %33 : vector<8x128xf32>
    %36 = vector.broadcast %cst_15 : f32 to vector<8x128xf32>
    %37 = arith.minimumf %36, %35 : vector<8x128xf32>
    %cst_16 = arith.constant 1.000000e+00 : f32
    %38 = vector.broadcast %cst_16 : f32 to vector<8x128xf32>
    %39 = arith.subf %38, %37 : vector<8x128xf32>
    %40 = arith.mulf %37, %39 : vector<8x128xf32>
    %41 = math.sqrt %40 : vector<8x128xf32>
    %cst_17 = arith.constant 2.000000e+00 : f32
    %42 = vector.broadcast %cst_17 : f32 to vector<8x128xf32>
    %43 = arith.mulf %42, %41 : vector<8x128xf32>
    %cst_18 = arith.constant 2.000000e+00 : f32
    %44 = vector.broadcast %cst_18 : f32 to vector<8x128xf32>
    %45 = arith.mulf %44, %37 : vector<8x128xf32>
    %cst_19 = arith.constant 1.000000e+00 : f32
    %46 = vector.broadcast %cst_19 : f32 to vector<8x128xf32>
    %47 = arith.subf %46, %45 : vector<8x128xf32>
    %48 = math.atan2 %43, %47 : vector<8x128xf32>
    %cst_20 = arith.constant 6.371000e+03 : f32
    %49 = vector.broadcast %cst_20 : f32 to vector<8x128xf32>
    %50 = arith.mulf %49, %48 : vector<8x128xf32>
    %51 = vector.shape_cast %50 : vector<8x128xf32> to vector<1x8x128xf32>
    %c0_21 = arith.constant 0 : index
    %c0_22 = arith.constant 0 : index
    %52 = vector.load %arg4[%c0_21, %c0_22] : memref<8x128xf32, #tpu.memory_space<vmem>>, vector<8x128xf32>
    %cst_23 = arith.constant dense<0.000000e+00> : vector<8x128xf32>
    %53 = vector.multi_reduction <add>, %51, %cst_23 [0] : vector<1x8x128xf32> to vector<8x128xf32>
    %54 = arith.addf %52, %53 : vector<8x128xf32>
    %c0_24 = arith.constant 0 : index
    %c0_25 = arith.constant 0 : index
    %55 = vector.load %arg4[%c0_24, %c0_25] : memref<8x128xf32, #tpu.memory_space<vmem>>, vector<8x128xf32>
    tpu.vector_store %arg4[%c0_24, %c0_25], %54 {strides = array<i32>} : memref<8x128xf32, #tpu.memory_space<vmem>>, vector<8x128xf32>,
    %c0_26 = arith.constant 0 : index
    %c0_27 = arith.constant 0 : index
    %56 = vector.load %arg5[%c0_26, %c0_27] : memref<8x128xf32, #tpu.memory_space<vmem>>, vector<8x128xf32>
    %57 = arith.mulf %51, %51 : vector<1x8x128xf32>
    %cst_28 = arith.constant dense<0.000000e+00> : vector<8x128xf32>
    %58 = vector.multi_reduction <add>, %57, %cst_28 [0] : vector<1x8x128xf32> to vector<8x128xf32>
    %59 = arith.addf %56, %58 : vector<8x128xf32>
    %c0_29 = arith.constant 0 : index
    %c0_30 = arith.constant 0 : index
    %60 = vector.load %arg5[%c0_29, %c0_30] : memref<8x128xf32, #tpu.memory_space<vmem>>, vector<8x128xf32>
    tpu.vector_store %arg5[%c0_29, %c0_30], %59 {strides = array<i32>} : memref<8x128xf32, #tpu.memory_space<vmem>>, vector<8x128xf32>,
    %c0_i32_31 = arith.constant 0 : i32
    %61 = arith.cmpi eq, %arg1, %c0_i32_31 : i32
    %62 = arith.extui %61 : i1 to i32
    %c0_i32_32 = arith.constant 0 : i32
    %63 = arith.cmpi ne, %62, %c0_i32_32 : i32
    scf.if %63 {
      %c0_33 = arith.constant 0 : index
      %c0_34 = arith.constant 0 : index
      %64 = vector.load %arg4[%c0_33, %c0_34] : memref<8x128xf32, #tpu.memory_space<vmem>>, vector<8x128xf32>
      %c0_35 = arith.constant 0 : index
      %c0_36 = arith.constant 0 : index
      %c0_37 = arith.constant 0 : index
      %c0_38 = arith.constant 0 : index
      %65 = vector.load %arg3[%c0_35, %c0_36, %c0_37, %c0_38] : memref<1x2x8x128xf32, #tpu.memory_space<vmem>>, vector<1x1x8x128xf32>
      %66 = vector.shape_cast %65 : vector<1x1x8x128xf32> to vector<8x128xf32>
      %67 = vector.shape_cast %64 : vector<8x128xf32> to vector<1x1x8x128xf32>
      tpu.vector_store %arg3[%c0_35, %c0_36, %c0_37, %c0_38], %67 {strides = array<i32>} : memref<1x2x8x128xf32, #tpu.memory_space<vmem>>, vector<1x1x8x128xf32>,
      %c0_39 = arith.constant 0 : index
      %c0_40 = arith.constant 0 : index
      %68 = vector.load %arg5[%c0_39, %c0_40] : memref<8x128xf32, #tpu.memory_space<vmem>>, vector<8x128xf32>
      %c0_41 = arith.constant 0 : index
      %c1_42 = arith.constant 1 : index
      %c0_43 = arith.constant 0 : index
      %c0_44 = arith.constant 0 : index
      %69 = vector.load %arg3[%c0_41, %c1_42, %c0_43, %c0_44] : memref<1x2x8x128xf32, #tpu.memory_space<vmem>>, vector<1x1x8x128xf32>
      %70 = vector.shape_cast %69 : vector<1x1x8x128xf32> to vector<8x128xf32>
      %71 = vector.shape_cast %68 : vector<8x128xf32> to vector<1x1x8x128xf32>
      tpu.vector_store %arg3[%c0_41, %c1_42, %c0_43, %c0_44], %71 {strides = array<i32>} : memref<1x2x8x128xf32, #tpu.memory_space<vmem>>, vector<1x1x8x128xf32>,
    } else {
    }
    return
  }
  func.func @transform_0(%arg0: i32, %arg1: i32) -> (i32, i32, i32) {
    %c1_i32 = arith.constant 1 : i32
    %0 = arith.muli %arg0, %c1_i32 : i32
    %1 = arith.addi %0, %arg1 : i32
    %c0_i32 = arith.constant 0 : i32
    %c0_i32_0 = arith.constant 0 : i32
    %c0_i32_1 = arith.constant 0 : i32
    return %c0_i32, %1, %c0_i32_0 : i32, i32, i32
  }
  func.func @transform_1(%arg0: i32, %arg1: i32) -> (i32, i32, i32, i32) {
    %c0_i32 = arith.constant 0 : i32
    %c0_i32_0 = arith.constant 0 : i32
    %c0_i32_1 = arith.constant 0 : i32
    %c0_i32_2 = arith.constant 0 : i32
    return %arg0, %c0_i32, %c0_i32_0, %c0_i32_1 : i32, i32, i32, i32
  }
}

</mosaic_0001>

<llo_original>
// kernel: tpu_custom_call.1
$region0: #{tpu_custom_call.1}
  #allocation0 [shape = 'u32[]', space=smem, size = 0x4, offset = 0x4, fixed_abs, tag = 'smem constant byte address 0x4 - core index']
  #allocation1 [shape = 'u32[144,128]{1,0:T(1,128)}', space=vmem, size = 0x12000, scoped, tag = 'internal scratch']
  #allocation2 [shape = 'f32[8,128]{1,0:T(8,128)}', space=vmem, size = 0x1000, scoped, tag = 'scratch operand']
  #allocation3 [shape = 'f32[8,128]{1,0:T(8,128)}', space=vmem, size = 0x1000, scoped, tag = 'scratch operand']
  %s0 = inlined_call_operand.hbm [shape: f32[4,16,128], index: 0, kind: input, shape index: {}]
  %s1 = inlined_call_operand.hbm [shape: f32[2,2,8,128], index: 1, kind: output, shape index: {}]
  %s2 = sld [smem:[#allocation0]]
  $region49: #{tpu_custom_call.1} parent=0
    _
  %s4 = ssub.s32 1, %s2
  %s5 = scalar_select 0, %s4, %s2
  $region1: #{tpu_custom_call.1} parent=0
    #allocation4 [shape = 'u8[32768]{0}', space=vmem, size = 0x8000, scoped, tag = 'input window, operand 0']
    #allocation5 [shape = 's32[2]{0}', space=sflag, size = 0x8, scoped, tag = 'scoped memory for tpu_custom_call.1']
    #allocation6 [shape = 's32[2]{0}', space=sflag, size = 0x8, scoped, tag = 'scoped memory for tpu_custom_call.1']
    #allocation7 [shape = 'u8[16384]{0}', space=vmem, size = 0x4000, scoped, tag = 'output window, operand 0']
    %6 = vsyncpa [#allocation5], 0
    %s7 = scalar_lea.sflag [#allocation5], 1
    %8 = vsyncpa %s7, 0
    %9 = vsyncpa [#allocation6], 0
    %s10 = scalar_lea.sflag [#allocation6], 1
    %11 = vsyncpa %s10, 0
    loop: start=0, step=1, limit=4
    $region2: #{tpu_custom_call.1} parent=1 // loop_pre_header
      _
    $region3: #{tpu_custom_call.1} parent=1 // loop_header
      %s13 = sphi 0, %s17
      %p14 = scmp.ge.s32.totalorder %s13, 4
      %s20 = sphi 0, %s32
      %s21 = sphi 0, %s28
      %s22 = sphi 0, %s20
      %s23 = sphi 0, %s21
      %s24 = sphi 0, %s22
      %s25 = sphi 0, %s23
      %s37 = sphi 0, %s39
      %s40 = sphi 0, %s37
      %s41 = sphi 0, %s40
      %s57 = sphi 0, %s41
      %s63 = sphi 0, %s65
      %s66 = sphi 0, %s63
      %s67 = sphi 0, %s66
      %s83 = sphi 0, %s67
    $region4: #{tpu_custom_call.1} parent=1 // loop_header_branch
      %16 = sbr.rel (%p14) target = $region8
    $region5: #{tpu_custom_call.1} parent=1 // loop_body
      %s18 = ssub.s32 %s13, 1
      %s19 = ssub.s32 %s13, 2
      %s26 = sadd.s32 1, %s21
      %p27 = scmp.ge.s32.totalorder %s26, 1
      %s28 = scalar_select %p27, 0, %s26
      %s29 = sadd.s32 1, %s20
      %s30 = scalar_select %p27, %s29, %s20
      %p31 = scmp.ge.s32.totalorder %s30, 2
      %s32 = scalar_select %p31, 0, %s30
      %s33 = sadd.s32 %s20, %s21
      %s34 = sadd.s32 %s32, %s28
      %s35 = ssub.s32 %s33, %s34
      %p36 = scmp.eq.s32.totalorder %s35, 0
      %s38 = sadd.s32 %s37, 1
      %s39 = scalar_select %p36, %s37, %s38
      %p42 = pneg %p36
      %p43 = scmp.eq.s32.totalorder %s13, 1
      %p44 = por %p42, %p43
      %p45 = scmp.ne.s32.totalorder %s37, %s40
      %p46 = scmp.eq.s32.totalorder %s13, 0
      %p47 = por %p45, %p46
      %p48 = scmp.ne.s32.totalorder %s37, %s40
      %p49 = scmp.eq.s32.totalorder %s18, 1
      %p50 = por %p48, %p49
      %p51 = scmp.ne.s32.totalorder %s40, %s41
      %p52 = scmp.eq.s32.totalorder %s18, 0
      %p53 = por %p51, %p52
      %p54 = scmp.ne.s32.totalorder %s40, %s41
      %p55 = scmp.eq.s32.totalorder %s19, 1
      %p56 = por %p54, %p55
      %p58 = scmp.ne.s32.totalorder %s41, %s57
      %p59 = scmp.eq.s32.totalorder %s19, 0
      %p60 = por %p58, %p59
      %s61 = ssub.s32 %s20, %s32
      %p62 = scmp.eq.s32.totalorder %s61, 0
      %s64 = sadd.s32 %s63, 1
      %s65 = scalar_select %p62, %s63, %s64
      %p68 = pneg %p62
      %p69 = scmp.eq.s32.totalorder %s13, 1
      %p70 = por %p68, %p69
      %p71 = scmp.ne.s32.totalorder %s63, %s66
      %p72 = scmp.eq.s32.totalorder %s13, 0
      %p73 = por %p71, %p72
      %p74 = scmp.ne.s32.totalorder %s63, %s66
      %p75 = scmp.eq.s32.totalorder %s18, 1
      %p76 = por %p74, %p75
      %p77 = scmp.ne.s32.totalorder %s66, %s67
      %p78 = scmp.eq.s32.totalorder %s18, 0
      %p79 = por %p77, %p78
      %p80 = scmp.ne.s32.totalorder %s66, %s67
      %p81 = scmp.eq.s32.totalorder %s19, 1
      %p82 = por %p80, %p81
      %p84 = scmp.ne.s32.totalorder %s67, %s83
      %p85 = scmp.eq.s32.totalorder %s19, 0
      %p86 = por %p84, %p85
      %p87 = scmp.le.s32.totalorder 1, %s13
      %p88 = scmp.lt.s32.totalorder %s13, 3
      %p89 = pnand %p87, %p88
      %p90 = pneg %p89
      // Predicated region
      $region9: #{tpu_custom_call.1} parent=5 // pred_check
        _
      $region10: #{tpu_custom_call.1} parent=5 // pred_check_branch
        %92 = sbr.rel (%p89) target = $region12
      $region11: #{tpu_custom_call.1} parent=5 // pred_region
        %s93 = ssub.s32 %s13, 1
      $region12: #{tpu_custom_call.1} parent=5 // pred_fallthru
        _
      %p94 = scmp.lt.s32.totalorder %s13, 2
      // Predicated region
      $region13: #{tpu_custom_call.1} parent=5 // pred_check
        %p95 = pneg %p94
      $region14: #{tpu_custom_call.1} parent=5 // pred_check_branch
        %97 = sbr.rel (%p95) target = $region16
      $region15: #{tpu_custom_call.1} parent=5 // pred_region
        // Predicated region
        $region17: #{tpu_custom_call.1} parent=15 // pred_check
          %p98 = pneg %p47
        $region18: #{tpu_custom_call.1} parent=15 // pred_check_branch
          %100 = sbr.rel (%p98) target = $region20
        $region19: #{tpu_custom_call.1} parent=15 // pred_region
          %s101 = sand.u32 %s37, 1
          %s102 = scalar_lea.sflag [#allocation5], %s101
          %s103 = sand.u32 %s37, 1
          %s104 = smul.addr %s103, 32
          %s105 = scalar_lea.vmem [#allocation4], %s104
          %s106 = sadd.s32 %s20, %s21
          %s108 = ssub.s32 512, 512
          %109 = vsyncadd %s102, %s108
          %s110 = smul.addr %s106, 128
          %s111 = scalar_lea.hbm %s0, %s110
          %s112 = sshll.u32 %s105, 4
          %s113 = int_to_ptr.vmem [resolvable:$true] %s112
          %118 = dma.hbm_to_vmem [thread:$0]  %s111, 512, %s113, %s102, 256, 128, 8
        $region20: #{tpu_custom_call.1} parent=15 // pred_fallthru
          _
      $region16: #{tpu_custom_call.1} parent=5 // pred_fallthru
        _
      %p119 = scmp.le.s32.totalorder 1, %s13
      %p120 = scmp.lt.s32.totalorder %s13, 3
      %p121 = pnand %p119, %p120
      %p122 = pneg %p121
      // Predicated region
      $region21: #{tpu_custom_call.1} parent=5 // pred_check
        _
      $region22: #{tpu_custom_call.1} parent=5 // pred_check_branch
        %124 = sbr.rel (%p121) target = $region24
      $region23: #{tpu_custom_call.1} parent=5 // pred_region
        %s125 = ssub.s32 %s13, 1
        %s126 = sand.u32 %s40, 1
        %s127 = scalar_lea.sflag [#allocation5], %s126
        %s128 = sand.u32 %s40, 1
        %s129 = smul.addr %s128, 32
        %s130 = scalar_lea.vmem [#allocation4], %s129
        // Predicated region
        $region25: #{tpu_custom_call.1} parent=23 // pred_check
          %p131 = pneg %p53
        $region26: #{tpu_custom_call.1} parent=23 // pred_check_branch
          %133 = sbr.rel (%p131) target = $region28
        $region27: #{tpu_custom_call.1} parent=23 // pred_region
          %134 = dma.done %s127, 512
        $region28: #{tpu_custom_call.1} parent=23 // pred_fallthru
          _
        %s135 = sand.u32 %s40, 1
        %s136 = scalar_lea.sflag [#allocation5], %s135
        %s137 = sand.u32 %s40, 1
        %s138 = smul.addr %s137, 32
        %s139 = scalar_lea.vmem [#allocation4], %s138
        %p140 = pneg %p53
        %p141 = pneg %p50
        %p142 = pneg %p79
        %p143 = pneg %p76
        %s144 = sand.u32 %s66, 1
        %s145 = scalar_lea.sflag [#allocation6], %s144
        %s146 = sand.u32 %s66, 1
        %s147 = smul.addr %s146, 16
        %s148 = scalar_lea.vmem [#allocation7], %s147
        %s149 = sadd.s32 %s22, %s23
        %p150 = scmp.eq.s32.totalorder %s23, 0
        // Predicated region
        $region29: #{tpu_custom_call.1} parent=23 // pred_check
          %p151 = pneg %p150
        $region30: #{tpu_custom_call.1} parent=23 // pred_check_branch
          %153 = sbr.rel (%p151) target = $region32
        $region31: #{tpu_custom_call.1} parent=23 // pred_region
          %154 = vst [vmem:[#allocation2] sm:$0xff] 0.0
          %155 = vst [vmem:[#allocation3] sm:$0xff] 0.0
        $region32: #{tpu_custom_call.1} parent=23 // pred_fallthru
          _
        %v156 = vld [vmem:[%s130] sm:$0xff]
        %s157 = scalar_lea.vmem %s130, 8 [#allocation4]
        %v158 = vld [vmem:[%s157] sm:$0xff]
        %s159 = scalar_lea.vmem %s130, 16 [#allocation4]
        %v160 = vld [vmem:[%s159] sm:$0xff]
        %s161 = scalar_lea.vmem %s130, 24 [#allocation4]
        %v162 = vld [vmem:[%s161] sm:$0xff]
        %v163 = vmul.f32 %v162, 0.017453292
        %v164 = vmul.f32 %v158, 0.017453292
        %v165 = vsub.f32 %v158, %v162
        %v166 = vmul.f32 %v165, 0.017453292
        %v167 = vsub.f32 %v156, %v160
        %v168 = vmul.f32 %v167, 0.017453292
        %v169 = vmul.f32 %v166, 0.5
        %v170 = vand.u32 2147483647, %v169
        %vm171 = vcmp.le.f32.partialorder %v170, 0.7853982
        %vm172 = vcmp.lt.s32.totalorder %v169, 0
        %v173 = vand.u32 %v169, 2139095040
        %v174 = vshrl.u32 %v173, 23
        %v175 = vsub.s32 %v174, 127
        %v176 = vand.u32 2147483647, %v169
        %v177 = vand.u32 %v176, 8388607
        %v178 = vor.u32 %v177, 8388608
        %v179 = vsub.s32 0, %v178
        %v180 = vadd.s32 %v175, 1
        %vm181 = vcmp.gt.s32.totalorder %v180, 0
        %v182 = vsel %vm181, %v180, 0
        %v183 = vshrl.u32 %v182, 5
        %v184 = vand.u32 %v182, 31
        %v185 = vsub.s32 32, %v184
        %v186 = vshrl.u32 683565275, %v185
        %v187 = vshll.u32 683565275, %v184
        %v188 = vshrl.u32 2475754826, %v185
        %v189 = vor.u32 %v187, %v188
        %v190 = vshll.u32 2475754826, %v184
        %v191 = vshrl.u32 2131351028, %v185
        %v192 = vor.u32 %v190, %v191
        %v193 = vshll.u32 2131351028, %v184
        %v194 = vshrl.u32 2102212464, %v185
        %v195 = vor.u32 %v193, %v194
        %v196 = vshll.u32 2102212464, %v184
        %v197 = vshrl.u32 920167782, %v185
        %v198 = vor.u32 %v196, %v197
        %v199 = vshll.u32 920167782, %v184
        %v200 = vshrl.u32 1326507024, %v185
        %v201 = vor.u32 %v199, %v200
        %vm202 = vcmp.lt.s32.totalorder %v183, 1
        %vm203 = vcmp.lt.s32.totalorder %v183, 2
        %vm204 = vcmp.lt.s32.totalorder %v183, 3
        %vm205 = vcmp.lt.s32.totalorder %v183, 4
        %v206 = vsel %vm202, %v186, %v189
        %v207 = vsel %vm205, %v195, 2102212464
        %v208 = vsel %vm204, %v192, %v207
        %v209 = vsel %vm203, %v206, %v208
        %v210 = vsel %vm202, %v189, %v192
        %v211 = vsel %vm205, %v198, 920167782
        %v212 = vsel %vm204, %v195, %v211
        %v213 = vsel %vm203, %v210, %v212
        %v214 = vsel %vm202, %v192, %v195
        %v215 = vsel %vm205, %v201, 1326507024
        %v216 = vsel %vm204, %v198, %v215
        %v217 = vsel %vm203, %v214, %v216
        %v218 = vshll.u32 %v178, 8
        %v219 = vmul.u32.u64.compose %v218, %v217
        %v220 = vextract.low.u32 %v219
        %v221 = vextract.high.u32 %v219
        %v222 = vmul.u32.u64.compose %v218, %v213
        %v223 = vextract.low.u32 %v222
        %v224 = vextract.high.u32 %v222
        %v225 = vmul.u32 %v218, %v209
        %v226 = vadd.s32 %v221, %v223
        %vm227 = vc.u32 %v221, %v223
        %v228 = vadd.s32 %v224, 1
        %v229 = vsel %vm227, %v228, %v224
        %v230 = vadd.s32 %v225, %v229
        %v231 = vadd.s32 %v230, 536870912
        %v232 = vshrl.u32 %v231, 30
        %v233 = vshll.u32 %v232, 30
        %v234 = vsub.s32 %v230, %v233
        %vm235 = vcmp.lt.s32.totalorder %v234, 0
        %v236 = vsub.s32 0, %v234
        %v237 = vsel %vm235, %v236, %v234
        %v238 = vclz %v237
        %v239 = vsub.s32 %v238, 2
        %vm240 = vcmp.gt.s32.totalorder 0, %v239
        %v241 = vsel %vm240, 0, %v239
        %v242 = vsub.s32 32, %v241
        %v243 = vshll.u32 %v234, %v241
        %v244 = vshrl.u32 %v226, %v242
        %v245 = vor.u32 %v243, %v244
        %v246 = vsub.s32 4294967266, %v241
        %v247 = vadd.s32 %v246, 127
        %v248 = vshll.u32 %v247, 23
        %v249 = vor.u32 4788187, %v248
        %v250 = vand.u32 2147483647, %v249
        %v252 = vcvt.s32.f32 %v245
        %v253 = vmul.f32 %v252, %v250
        %v254 = vxor.u32 %v253, 2147483648
        %v255 = vsel %vm172, %v254, %v253
        %v256 = vsub.s32 4, %v232
        %v257 = vsel %vm172, %v256, %v232
        %v258 = vsel %vm171, %v169, %v255
        %v259 = vsel %vm171, 0, %v257
        %v260 = vcosq.f32.pop %v258
        %v261 = vsinq.f32.pop %v258
        %vm262 = vweird.f32 %v169
        %v263 = vadd.s32 %v259, 3
        %v264 = vand.u32 %v263, 3
        %vm265 = vcmp.lt.s32.totalorder %v264, 2
        %vm266 = vcmp.eq.s32.totalorder %v264, 0
        %v267 = vxor.u32 %v261, 2147483648
        %v268 = vsel %vm266, %v260, %v267
        %vm269 = vcmp.eq.s32.totalorder %v264, 2
        %v270 = vxor.u32 %v260, 2147483648
        %v271 = vsel %vm269, %v270, %v261
        %v272 = vsel %vm265, %v268, %v271
        %v273 = vsel %vm262, nan, %v272
        %v274 = vmul.f32 %v168, 0.5
        %v275 = vand.u32 2147483647, %v274
        %vm276 = vcmp.le.f32.partialorder %v275, 0.7853982
        %vm277 = vcmp.lt.s32.totalorder %v274, 0
        %v278 = vand.u32 %v274, 2139095040
        %v279 = vshrl.u32 %v278, 23
        %v280 = vsub.s32 %v279, 127
        %v281 = vand.u32 2147483647, %v274
        %v282 = vand.u32 %v281, 8388607
        %v283 = vor.u32 %v282, 8388608
        %v284 = vsub.s32 0, %v283
        %v285 = vadd.s32 %v280, 1
        %vm286 = vcmp.gt.s32.totalorder %v285, 0
        %v287 = vsel %vm286, %v285, 0
        %v288 = vshrl.u32 %v287, 5
        %v289 = vand.u32 %v287, 31
        %v290 = vsub.s32 32, %v289
        %v291 = vshrl.u32 683565275, %v290
        %v292 = vshll.u32 683565275, %v289
        %v293 = vshrl.u32 2475754826, %v290
        %v294 = vor.u32 %v292, %v293
        %v295 = vshll.u32 2475754826, %v289
        %v296 = vshrl.u32 2131351028, %v290
        %v297 = vor.u32 %v295, %v296
        %v298 = vshll.u32 2131351028, %v289
        %v299 = vshrl.u32 2102212464, %v290
        %v300 = vor.u32 %v298, %v299
        %v301 = vshll.u32 2102212464, %v289
        %v302 = vshrl.u32 920167782, %v290
        %v303 = vor.u32 %v301, %v302
        %v304 = vshll.u32 920167782, %v289
        %v305 = vshrl.u32 1326507024, %v290
        %v306 = vor.u32 %v304, %v305
        %vm307 = vcmp.lt.s32.totalorder %v288, 1
        %vm308 = vcmp.lt.s32.totalorder %v288, 2
        %vm309 = vcmp.lt.s32.totalorder %v288, 3
        %vm310 = vcmp.lt.s32.totalorder %v288, 4
        %v311 = vsel %vm307, %v291, %v294
        %v312 = vsel %vm310, %v300, 2102212464
        %v313 = vsel %vm309, %v297, %v312
        %v314 = vsel %vm308, %v311, %v313
        %v315 = vsel %vm307, %v294, %v297
        %v316 = vsel %vm310, %v303, 920167782
        %v317 = vsel %vm309, %v300, %v316
        %v318 = vsel %vm308, %v315, %v317
        %v319 = vsel %vm307, %v297, %v300
        %v320 = vsel %vm310, %v306, 1326507024
        %v321 = vsel %vm309, %v303, %v320
        %v322 = vsel %vm308, %v319, %v321
        %v323 = vshll.u32 %v283, 8
        %v324 = vmul.u32.u64.compose %v323, %v322
        %v325 = vextract.low.u32 %v324
        %v326 = vextract.high.u32 %v324
        %v327 = vmul.u32.u64.compose %v323, %v318
        %v328 = vextract.low.u32 %v327
        %v329 = vextract.high.u32 %v327
        %v330 = vmul.u32 %v323, %v314
        %v331 = vadd.s32 %v326, %v328
        %vm332 = vc.u32 %v326, %v328
        %v333 = vadd.s32 %v329, 1
        %v334 = vsel %vm332, %v333, %v329
        %v335 = vadd.s32 %v330, %v334
        %v336 = vadd.s32 %v335, 536870912
        %v337 = vshrl.u32 %v336, 30
        %v338 = vshll.u32 %v337, 30
        %v339 = vsub.s32 %v335, %v338
        %vm340 = vcmp.lt.s32.totalorder %v339, 0
        %v341 = vsub.s32 0, %v339
        %v342 = vsel %vm340, %v341, %v339
        %v343 = vclz %v342
        %v344 = vsub.s32 %v343, 2
        %vm345 = vcmp.gt.s32.totalorder 0, %v344
        %v346 = vsel %vm345, 0, %v344
        %v347 = vsub.s32 32, %v346
        %v348 = vshll.u32 %v339, %v346
        %v349 = vshrl.u32 %v331, %v347
        %v350 = vor.u32 %v348, %v349
        %v351 = vsub.s32 4294967266, %v346
        %v352 = vadd.s32 %v351, 127
        %v353 = vshll.u32 %v352, 23
        %v354 = vor.u32 4788187, %v353
        %v355 = vand.u32 2147483647, %v354
        %v357 = vcvt.s32.f32 %v350
        %v358 = vmul.f32 %v357, %v355
        %v359 = vxor.u32 %v358, 2147483648
        %v360 = vsel %vm277, %v359, %v358
        %v361 = vsub.s32 4, %v337
        %v362 = vsel %vm277, %v361, %v337
        %v363 = vsel %vm276, %v274, %v360
        %v364 = vsel %vm276, 0, %v362
        %v365 = vcosq.f32.pop %v363
        %v366 = vsinq.f32.pop %v363
        %vm367 = vweird.f32 %v274
        %v368 = vadd.s32 %v364, 3
        %v369 = vand.u32 %v368, 3
        %vm370 = vcmp.lt.s32.totalorder %v369, 2
        %vm371 = vcmp.eq.s32.totalorder %v369, 0
        %v372 = vxor.u32 %v366, 2147483648
        %v373 = vsel %vm371, %v365, %v372
        %vm374 = vcmp.eq.s32.totalorder %v369, 2
        %v375 = vxor.u32 %v365, 2147483648
        %v376 = vsel %vm374, %v375, %v366
        %v377 = vsel %vm370, %v373, %v376
        %v378 = vsel %vm367, nan, %v377
        %v379 = vmul.f32 %v273, %v273
        %v380 = vand.u32 2147483647, %v163
        %vm381 = vcmp.le.f32.partialorder %v380, 0.7853982
        %vm382 = vcmp.lt.s32.totalorder %v163, 0
        %v383 = vand.u32 %v163, 2139095040
        %v384 = vshrl.u32 %v383, 23
        %v385 = vsub.s32 %v384, 127
        %v386 = vand.u32 2147483647, %v163
        %v387 = vand.u32 %v386, 8388607
        %v388 = vor.u32 %v387, 8388608
        %v389 = vsub.s32 0, %v388
        %v390 = vadd.s32 %v385, 1
        %vm391 = vcmp.gt.s32.totalorder %v390, 0
        %v392 = vsel %vm391, %v390, 0
        %v393 = vshrl.u32 %v392, 5
        %v394 = vand.u32 %v392, 31
        %v395 = vsub.s32 32, %v394
        %v396 = vshrl.u32 683565275, %v395
        %v397 = vshll.u32 683565275, %v394
        %v398 = vshrl.u32 2475754826, %v395
        %v399 = vor.u32 %v397, %v398
        %v400 = vshll.u32 2475754826, %v394
        %v401 = vshrl.u32 2131351028, %v395
        %v402 = vor.u32 %v400, %v401
        %v403 = vshll.u32 2131351028, %v394
        %v404 = vshrl.u32 2102212464, %v395
        %v405 = vor.u32 %v403, %v404
        %v406 = vshll.u32 2102212464, %v394
        %v407 = vshrl.u32 920167782, %v395
        %v408 = vor.u32 %v406, %v407
        %v409 = vshll.u32 920167782, %v394
        %v410 = vshrl.u32 1326507024, %v395
        %v411 = vor.u32 %v409, %v410
        %vm412 = vcmp.lt.s32.totalorder %v393, 1
        %vm413 = vcmp.lt.s32.totalorder %v393, 2
        %vm414 = vcmp.lt.s32.totalorder %v393, 3
        %vm415 = vcmp.lt.s32.totalorder %v393, 4
        %v416 = vsel %vm412, %v396, %v399
        %v417 = vsel %vm415, %v405, 2102212464
        %v418 = vsel %vm414, %v402, %v417
        %v419 = vsel %vm413, %v416, %v418
        %v420 = vsel %vm412, %v399, %v402
        %v421 = vsel %vm415, %v408, 920167782
        %v422 = vsel %vm414, %v405, %v421
        %v423 = vsel %vm413, %v420, %v422
        %v424 = vsel %vm412, %v402, %v405
        %v425 = vsel %vm415, %v411, 1326507024
        %v426 = vsel %vm414, %v408, %v425
        %v427 = vsel %vm413, %v424, %v426
        %v428 = vshll.u32 %v388, 8
        %v429 = vmul.u32.u64.compose %v428, %v427
        %v430 = vextract.low.u32 %v429
        %v431 = vextract.high.u32 %v429
        %v432 = vmul.u32.u64.compose %v428, %v423
        %v433 = vextract.low.u32 %v432
        %v434 = vextract.high.u32 %v432
        %v435 = vmul.u32 %v428, %v419
        %v436 = vadd.s32 %v431, %v433
        %vm437 = vc.u32 %v431, %v433
        %v438 = vadd.s32 %v434, 1
        %v439 = vsel %vm437, %v438, %v434
        %v440 = vadd.s32 %v435, %v439
        %v441 = vadd.s32 %v440, 536870912
        %v442 = vshrl.u32 %v441, 30
        %v443 = vshll.u32 %v442, 30
        %v444 = vsub.s32 %v440, %v443
        %vm445 = vcmp.lt.s32.totalorder %v444, 0
        %v446 = vsub.s32 0, %v444
        %v447 = vsel %vm445, %v446, %v444
        %v448 = vclz %v447
        %v449 = vsub.s32 %v448, 2
        %vm450 = vcmp.gt.s32.totalorder 0, %v449
        %v451 = vsel %vm450, 0, %v449
        %v452 = vsub.s32 32, %v451
        %v453 = vshll.u32 %v444, %v451
        %v454 = vshrl.u32 %v436, %v452
        %v455 = vor.u32 %v453, %v454
        %v456 = vsub.s32 4294967266, %v451
        %v457 = vadd.s32 %v456, 127
        %v458 = vshll.u32 %v457, 23
        %v459 = vor.u32 4788187, %v458
        %v460 = vand.u32 2147483647, %v459
        %v462 = vcvt.s32.f32 %v455
        %v463 = vmul.f32 %v462, %v460
        %v464 = vxor.u32 %v463, 2147483648
        %v465 = vsel %vm382, %v464, %v463
        %v466 = vsub.s32 4, %v442
        %v467 = vsel %vm382, %v466, %v442
        %v468 = vsel %vm381, %v163, %v465
        %v469 = vsel %vm381, 0, %v467
        %v470 = vcosq.f32.pop %v468
        %v471 = vsinq.f32.pop %v468
        %vm472 = vweird.f32 %v163
        %v473 = vand.u32 %v469, 3
        %vm474 = vcmp.lt.s32.totalorder %v473, 2
        %vm475 = vcmp.eq.s32.totalorder %v473, 0
        %v476 = vxor.u32 %v471, 2147483648
        %v477 = vsel %vm475, %v470, %v476
        %vm478 = vcmp.eq.s32.totalorder %v473, 2
        %v479 = vxor.u32 %v470, 2147483648
        %v480 = vsel %vm478, %v479, %v471
        %v481 = vsel %vm474, %v477, %v480
        %v482 = vsel %vm472, nan, %v481
        %v483 = vand.u32 2147483647, %v164
        %vm484 = vcmp.le.f32.partialorder %v483, 0.7853982
        %vm485 = vcmp.lt.s32.totalorder %v164, 0
        %v486 = vand.u32 %v164, 2139095040
        %v487 = vshrl.u32 %v486, 23
        %v488 = vsub.s32 %v487, 127
        %v489 = vand.u32 2147483647, %v164
        %v490 = vand.u32 %v489, 8388607
        %v491 = vor.u32 %v490, 8388608
        %v492 = vsub.s32 0, %v491
        %v493 = vadd.s32 %v488, 1
        %vm494 = vcmp.gt.s32.totalorder %v493, 0
        %v495 = vsel %vm494, %v493, 0
        %v496 = vshrl.u32 %v495, 5
        %v497 = vand.u32 %v495, 31
        %v498 = vsub.s32 32, %v497
        %v499 = vshrl.u32 683565275, %v498
        %v500 = vshll.u32 683565275, %v497
        %v501 = vshrl.u32 2475754826, %v498
        %v502 = vor.u32 %v500, %v501
        %v503 = vshll.u32 2475754826, %v497
        %v504 = vshrl.u32 2131351028, %v498
        %v505 = vor.u32 %v503, %v504
        %v506 = vshll.u32 2131351028, %v497
        %v507 = vshrl.u32 2102212464, %v498
        %v508 = vor.u32 %v506, %v507
        %v509 = vshll.u32 2102212464, %v497
        %v510 = vshrl.u32 920167782, %v498
        %v511 = vor.u32 %v509, %v510
        %v512 = vshll.u32 920167782, %v497
        %v513 = vshrl.u32 1326507024, %v498
        %v514 = vor.u32 %v512, %v513
        %vm515 = vcmp.lt.s32.totalorder %v496, 1
        %vm516 = vcmp.lt.s32.totalorder %v496, 2
        %vm517 = vcmp.lt.s32.totalorder %v496, 3
        %vm518 = vcmp.lt.s32.totalorder %v496, 4
        %v519 = vsel %vm515, %v499, %v502
        %v520 = vsel %vm518, %v508, 2102212464
        %v521 = vsel %vm517, %v505, %v520
        %v522 = vsel %vm516, %v519, %v521
        %v523 = vsel %vm515, %v502, %v505
        %v524 = vsel %vm518, %v511, 920167782
        %v525 = vsel %vm517, %v508, %v524
        %v526 = vsel %vm516, %v523, %v525
        %v527 = vsel %vm515, %v505, %v508
        %v528 = vsel %vm518, %v514, 1326507024
        %v529 = vsel %vm517, %v511, %v528
        %v530 = vsel %vm516, %v527, %v529
        %v531 = vshll.u32 %v491, 8
        %v532 = vmul.u32.u64.compose %v531, %v530
        %v533 = vextract.low.u32 %v532
        %v534 = vextract.high.u32 %v532
        %v535 = vmul.u32.u64.compose %v531, %v526
        %v536 = vextract.low.u32 %v535
        %v537 = vextract.high.u32 %v535
        %v538 = vmul.u32 %v531, %v522
        %v539 = vadd.s32 %v534, %v536
        %vm540 = vc.u32 %v534, %v536
        %v541 = vadd.s32 %v537, 1
        %v542 = vsel %vm540, %v541, %v537
        %v543 = vadd.s32 %v538, %v542
        %v544 = vadd.s32 %v543, 536870912
        %v545 = vshrl.u32 %v544, 30
        %v546 = vshll.u32 %v545, 30
        %v547 = vsub.s32 %v543, %v546
        %vm548 = vcmp.lt.s32.totalorder %v547, 0
        %v549 = vsub.s32 0, %v547
        %v550 = vsel %vm548, %v549, %v547
        %v551 = vclz %v550
        %v552 = vsub.s32 %v551, 2
        %vm553 = vcmp.gt.s32.totalorder 0, %v552
        %v554 = vsel %vm553, 0, %v552
        %v555 = vsub.s32 32, %v554
        %v556 = vshll.u32 %v547, %v554
        %v557 = vshrl.u32 %v539, %v555
        %v558 = vor.u32 %v556, %v557
        %v559 = vsub.s32 4294967266, %v554
        %v560 = vadd.s32 %v559, 127
        %v561 = vshll.u32 %v560, 23
        %v562 = vor.u32 4788187, %v561
        %v563 = vand.u32 2147483647, %v562
        %v565 = vcvt.s32.f32 %v558
        %v566 = vmul.f32 %v565, %v563
        %v567 = vxor.u32 %v566, 2147483648
        %v568 = vsel %vm485, %v567, %v566
        %v569 = vsub.s32 4, %v545
        %v570 = vsel %vm485, %v569, %v545
        %v571 = vsel %vm484, %v164, %v568
        %v572 = vsel %vm484, 0, %v570
        %v573 = vcosq.f32.pop %v571
        %v574 = vsinq.f32.pop %v571
        %vm575 = vweird.f32 %v164
        %v576 = vand.u32 %v572, 3
        %vm577 = vcmp.lt.s32.totalorder %v576, 2
        %vm578 = vcmp.eq.s32.totalorder %v576, 0
        %v579 = vxor.u32 %v574, 2147483648
        %v580 = vsel %vm578, %v573, %v579
        %vm581 = vcmp.eq.s32.totalorder %v576, 2
        %v582 = vxor.u32 %v573, 2147483648
        %v583 = vsel %vm581, %v582, %v574
        %v584 = vsel %vm577, %v580, %v583
        %v585 = vsel %vm575, nan, %v584
        %v586 = vmul.f32 %v482, %v585
        %v587 = vmul.f32 %v586, %v378
        %v588 = vmul.f32 %v587, %v378
        %v589 = vadd.f32 %v379, %v588
        %v590 = vmax.f32 %v589, 0.0
        %v591 = vmin.f32 %v590, 1.0
        %v592 = vsub.f32 1.0, %v591
        %v593 = vmul.f32 %v591, %v592
        %v594 = vrsqrt.pop %v593
        %v595 = vmul.f32 %v593, %v594
        %vm596 = vcmp.eq.f32.partialorder %v593, inf
        %v597 = vsel %vm596, %v593, %v595
        %vm598 = vcmp.eq.f32.partialorder %v593, 0.0
        %v599 = vand.u32 %v593, 2147483648
        %v600 = vsel %vm598, %v599, %v597
        %v601 = vmul.f32 %v600, 2.0
        %v602 = vmul.f32 %v591, 2.0
        %v603 = vsub.f32 1.0, %v602
        %v604 = vand.u32 2147483647, %v603
        %v605 = vand.u32 2147483647, %v601
        %v606 = vmin.f32 %v604, %v605
        %v607 = vmax.f32 %v604, %v605
        %v608 = vrcp.pop %v607
        %v609 = vmul.f32 %v606, %v608
        %v610 = vmul.f32 %v609, %v609
        %v611 = vmul.f32 0.002785687, %v610
        %v612 = vadd.f32 %v611, -0.015866
        %v613 = vmul.f32 %v612, %v610
        %v614 = vadd.f32 %v613, 0.04247222
        %v615 = vmul.f32 %v614, %v610
        %v616 = vadd.f32 %v615, -0.074975304
        %v617 = vmul.f32 %v616, %v610
        %v618 = vadd.f32 %v617, 0.1064488
        %v619 = vmul.f32 %v618, %v610
        %v620 = vadd.f32 %v619, -0.14207031
        %v621 = vmul.f32 %v620, %v610
        %v622 = vadd.f32 %v621, 0.19993454
        %v623 = vmul.f32 %v622, %v610
        %v624 = vadd.f32 %v623, -0.33333147
        %v625 = vmul.f32 %v624, %v610
        %v626 = vmul.f32 %v625, %v609
        %v627 = vadd.f32 %v626, %v609
        %vm628 = vcmp.gt.f32.partialorder %v605, %v604
        %v629 = vsub.f32 1.5707964, %v627
        %v630 = vsel %vm628, %v629, %v627
        %vm631 = vcmp.lt.f32.partialorder %v603, 0.0
        %v632 = vsub.f32 3.1415927, %v630
        %v633 = vsel %vm631, %v632, %v630
        %vm634 = vcmp.lt.s32.totalorder %v603, 0
        %v635 = vsel %vm634, 3.1415927, 0.0
        %vm636 = vcmp.eq.f32.partialorder %v601, 0.0
        %v637 = vsel %vm636, %v635, %v633
        %vm638 = vcmp.ne.f32.partialorder %v603, %v603
        %vm639 = vcmp.ne.f32.partialorder %v601, %v601
        %vm640 = vmor %vm638, %vm639
        %v641 = vsel %vm640, nan, %v637
        %vm642 = vcmp.lt.f32.partialorder %v603, 0.0
        %v643 = vsel %vm642, 2.3561945, 0.7853982
        %vm644 = vcmp.eq.s32.totalorder %v604, inf
        %vm645 = vcmp.eq.s32.totalorder %v605, inf
        %vm646 = vmand %vm644, %vm645
        %v647 = vsel %vm646, %v643, %v641
        %v648 = vand.u32 2147483647, %v647
        %v649 = vand.u32 %v601, 2147483648
        %v650 = vor.u32 %v648, %v649
        %v651 = vmul.f32 %v650, 6371.0
        %v652 = vld [vmem:[#allocation2] sm:$0xff]
        %v653 = vadd.f32 %v651, 0.0
        %v654 = vadd.f32 %v652, %v653
        %655 = vst [vmem:[#allocation2] sm:$0xff] %v654
        %v656 = vld [vmem:[#allocation3] sm:$0xff]
        %v657 = vmul.f32 %v651, %v651
        %v658 = vadd.f32 %v657, 0.0
        %v659 = vadd.f32 %v656, %v658
        %660 = vst [vmem:[#allocation3] sm:$0xff] %v659
        // Predicated region
        $region33: #{tpu_custom_call.1} parent=23 // pred_check
          %p661 = pneg %p150
        $region34: #{tpu_custom_call.1} parent=23 // pred_check_branch
          %663 = sbr.rel (%p661) target = $region36
        $region35: #{tpu_custom_call.1} parent=23 // pred_region
          %v664 = vld [vmem:[#allocation2] sm:$0xff]
          %665 = vst [vmem:[%s148] sm:$0xff] %v664
          %v666 = vld [vmem:[#allocation3] sm:$0xff]
          %s667 = scalar_lea.vmem %s148, 8 [#allocation7]
          %668 = vst [vmem:[%s667] sm:$0xff] %v666
        $region36: #{tpu_custom_call.1} parent=23 // pred_fallthru
          _
        %s669 = sand.u32 %s66, 1
        %s670 = scalar_lea.sflag [#allocation6], %s669
        %s671 = sand.u32 %s66, 1
        %s672 = smul.addr %s671, 16
        %s673 = scalar_lea.vmem [#allocation7], %s672
        // Predicated region
        $region37: #{tpu_custom_call.1} parent=23 // pred_check
          %p674 = pneg %p76
        $region38: #{tpu_custom_call.1} parent=23 // pred_check_branch
          %676 = sbr.rel (%p674) target = $region40
        $region39: #{tpu_custom_call.1} parent=23 // pred_region
          %s678 = ssub.s32 256, 256
          %679 = vsyncadd %s670, %s678
          %s680 = smul.addr %s22, 2
          %s681 = smul.addr %s680, 128
          %s682 = scalar_lea.hbm %s1, %s681
          %s683 = sshll.u32 %s673, 4
          %s684 = int_to_ptr.vmem [resolvable:$true] %s683
          %689 = dma.vmem_to_hbm [thread:$0]  %s684, 256, %s682, %s670, 128, 128, 8
        $region40: #{tpu_custom_call.1} parent=23 // pred_fallthru
          _
      $region24: #{tpu_custom_call.1} parent=5 // pred_fallthru
        _
      %p690 = scmp.le.s32.totalorder 2, %s13
      // Predicated region
      $region41: #{tpu_custom_call.1} parent=5 // pred_check
        %p691 = pneg %p690
      $region42: #{tpu_custom_call.1} parent=5 // pred_check_branch
        %693 = sbr.rel (%p691) target = $region44
      $region43: #{tpu_custom_call.1} parent=5 // pred_region
        %s694 = ssub.s32 %s13, 2
        // Predicated region
        $region45: #{tpu_custom_call.1} parent=43 // pred_check
          %p695 = pneg %p82
        $region46: #{tpu_custom_call.1} parent=43 // pred_check_branch
          %697 = sbr.rel (%p695) target = $region48
        $region47: #{tpu_custom_call.1} parent=43 // pred_region
          %s698 = sand.u32 %s67, 1
          %s699 = scalar_lea.sflag [#allocation6], %s698
          %s700 = sand.u32 %s67, 1
          %s701 = smul.addr %s700, 16
          %s702 = scalar_lea.vmem [#allocation7], %s701
          %703 = dma.done %s699, 256
        $region48: #{tpu_custom_call.1} parent=43 // pred_fallthru
          _
      $region44: #{tpu_custom_call.1} parent=5 // pred_fallthru
        _
    $region6: #{tpu_custom_call.1} parent=1 // loop_footer
      %s17 = sadd.s32 1, %s13
    $region7: #{tpu_custom_call.1} parent=1 // loop_footer_branch
      %12 = sbr.rel target = $region3
    $region8: #{tpu_custom_call.1} parent=1 // loop_exit
      _
    %704 = vsyncpa [#allocation5], 1
    %s705 = scalar_lea.sflag [#allocation5], 1
    %706 = vsyncpa %s705, 1
    %707 = vsyncpa [#allocation6], 1
    %s708 = scalar_lea.sflag [#allocation6], 1
    %709 = vsyncpa %s708, 1

</llo_original>
